<compile_context>
chip_gen: v5e
topology: v5e:2x2
jax: 0.10.0
libtpu: 0.0.40
codegen_flags: <defaults>
</compile_context>

<pallas_src>
import math
import numpy as np

import jax
import jax.numpy as jnp
from jax import lax
from jax.experimental import pallas as pl
from jax.experimental.pallas import tpu as pltpu


def _pack_kernel(offs_ref, cnts_ref, feats_hbm, out_ref, buf, sem):
    """Pack one batch's rows into its padded output block.

    offs_ref : SMEM (bs,) int32  start row of batch b in the sorted features
    cnts_ref : SMEM (bs,) int32  number of rows belonging to batch b
    feats_hbm: HBM  (N + L_pad, C)  batch-sorted features (zero-row padded)
    out_ref  : VMEM (L_pad, C)   output block for batch b (leading dim squeezed)
    buf      : VMEM (L_pad, C)   DMA landing buffer
    sem      : DMA semaphore (1,)
    """
    b = pl.program_id(0)
    l_pad, c = out_ref.shape

    # One contiguous block copy: counts[b] rows of this batch plus up to
    # (l_pad - counts[b]) trailing rows (later batches / zero padding), which
    # are masked off below.  Arbitrary (unaligned) row offsets are fine for DMA.
    cp = pltpu.make_async_copy(
        feats_hbm.at[pl.ds(offs_ref[b], l_pad), :], buf, sem.at[0])
    cp.start()
    cp.wait()

    # Zero every row past counts[b] and store the whole tile in one shot.
    cnt = cnts_ref[b]
    row_ids = lax.broadcasted_iota(jnp.int32, (l_pad, c), 0)
    tile = buf[...]
    out_ref[...] = jnp.where(row_ids < cnt, tile, jnp.zeros_like(tile))


def _pack_sparse_to_dense(indices, features, batch_size, max_length=None):
    """Pallas-backed equivalent of PositionEmbeddingSine3d.forward.

    NOTE: like jnp.bincount(length=batch_size), batch ids >= batch_size are
    assumed not to occur (caller guarantee, same as the previous version).
    """
    indices = jnp.asarray(indices)
    features = jnp.asarray(features)
    n, c = features.shape
    bids = indices[:, 0].astype(jnp.int32)

    counts = jnp.bincount(bids, length=batch_size).astype(jnp.int32)
    if max_length is None:
        # Mirrors torch.bincount(...).max().  This is one device->host sync and
        # one compile per distinct value; pass a static (bucketed) max_length
        # to make the whole path jittable / recompile-free.
        max_length = int(jax.device_get(jnp.max(counts)))
    max_length = int(max_length)
    # Round the padded length up to a sublane multiple for full-tile stores.
    l_pad = max(8, -(-max_length // 8) * 8)

    # --- host glue: sort rows by batch id so each batch is contiguous --------
    order = jnp.argsort(bids, stable=True)                 # stable: keeps row order
    sorted_feats = jnp.take(features, order, axis=0)       # (N, C) gather
    # Pad with l_pad zero rows so every (l_pad, C) window the kernel reads is
    # in bounds (offsets[b] + l_pad <= N + l_pad always).
    sorted_feats = jnp.concatenate(
        [sorted_feats, jnp.zeros((l_pad, c), features.dtype)], axis=0)
    offsets = (jnp.cumsum(counts) - counts).astype(jnp.int32)   # exclusive prefix sum

    # --- VMEM budget (explicit, v7x-safe): out double-buffer + DMA buffer ----
    itemsize = jnp.dtype(features.dtype).itemsize
    c_lanes = -(-c // 128) * 128                  # lane-padded channel width in VMEM
    vmem_need = 3 * l_pad * c_lanes * itemsize + (2 << 20)
    vmem_limit = int(min(max(vmem_need, 16 << 20), 100 << 20))

    grid_spec = pltpu.PrefetchScalarGridSpec(
        num_scalar_prefetch=2,                    # offsets, counts -> SMEM (1-D, no padding)
        grid=(batch_size,),
        in_specs=[pl.BlockSpec(memory_space=pl.ANY)],   # features stay in HBM
        out_specs=pl.BlockSpec((None, l_pad, c), lambda b, offs, cnts: (b, 0, 0)),
        scratch_shapes=[
            pltpu.VMEM((l_pad, c), features.dtype),
            pltpu.SemaphoreType.DMA((1,)),
        ],
    )
    out = pl.pallas_call(
        _pack_kernel,
        out_shape=jax.ShapeDtypeStruct((batch_size, l_pad, c), features.dtype),
        grid_spec=grid_spec,
        compiler_params=pltpu.CompilerParams(
            dimension_semantics=("parallel",),    # disjoint output blocks per batch
            vmem_limit_bytes=vmem_limit,
        ),
    )(offsets, counts, sorted_feats)

    # Trim the sublane rounding back to the exact reference shape.
    return out[:, :max_length, :]


class PositionEmbeddingSine3d:
    """JAX/Pallas port.  __init__ params are kept for API parity; the original
    forward never uses them (no sinusoid is ever computed)."""

    def __init__(self, num_pos_feats=64, temperature=10000, normalize=False, scale=None):
        self.num_pos_feats = num_pos_feats
        self.temperature = temperature
        self.normalize = normalize
        if scale is not None and normalize is False:
            raise ValueError('normalize should be True if scale is passed')
        if scale is None:
            scale = 2 * math.pi
        self.scale = scale
        # TODO(synk): num_pos_feats/temperature/normalize/scale are unused by
        # the reference forward, so the kernel does not consume them either.

    def forward(self, indices, features, batch_size, max_length=None):
        return _pack_sparse_to_dense(indices, features, batch_size, max_length)


def _reference_forward(indices, features, batch_size):
    """NumPy re-implementation of the PyTorch forward for verification."""
    inds = np.asarray(indices)
    feats_np = np.asarray(features)
    counts = np.bincount(inds[:, 0], minlength=batch_size)
    L = int(counts.max())
    out = np.zeros((batch_size, L, feats_np.shape[-1]), feats_np.dtype)
    for b in range(batch_size):
        m = inds[:, 0] == b
        out[b, : int(m.sum()), :] = feats_np[m]
    return out


if __name__ == "__main__":
    key = jax.random.PRNGKey(0)
    k_bid, k_coord, k_feat = jax.random.split(key, 3)

    batch_size, n_points, channels = 2, 20, 32
    bids = jax.random.randint(k_bid, (n_points,), 0, batch_size, dtype=jnp.int32)
    coords = jax.random.randint(k_coord, (n_points, 3), 0, 16, dtype=jnp.int32)
    indices = jnp.concatenate([bids[:, None], coords], axis=1)                # (N, 4)
    features = jax.random.normal(k_feat, (n_points, channels), jnp.float32)   # (N, C)

    module = PositionEmbeddingSine3d(num_pos_feats=64)
    out = module.forward(indices, features, batch_size)
    out = jax.block_until_ready(out)

    ref = _reference_forward(indices, features, batch_size)
    np.testing.assert_allclose(np.asarray(out), ref, atol=1e-6, rtol=1e-6)
    print("KERNEL_OK")
</pallas_src>

<mosaic_0001>
module attributes {stable_mosaic.version = 11 : i64} {
  func.func @_pack_kernel(%arg0: i32, %arg1: memref<2xi32, #tpu.memory_space<smem>>, %arg2: memref<2xi32, #tpu.memory_space<smem>>, %arg3: memref<36x32xf32, #tpu.memory_space<any>>, %arg4: memref<1x16x32xf32, #tpu.memory_space<vmem>>, %arg5: memref<16x32xf32, #tpu.memory_space<vmem>>, %arg6: memref<1x!tpu.dma_semaphore, #tpu.memory_space<semaphore_mem>>) attributes {dimension_semantics = [#tpu.dimension_semantics<parallel>], iteration_bounds = array<i64: 2>, scalar_prefetch = 2 : i64, scratch_operands = 2 : i64, tpu.core_type = #tpu.core_type<tc>, window_params = [{}, {transform_indices = @transform_1, window_bounds = array<i64: 1, 16, 32>}]} {
    %0 = arith.index_cast %arg0 : i32 to index
    %1 = memref.load %arg1[%0] : memref<2xi32, #tpu.memory_space<smem>>
    %c0_i32 = arith.constant 0 : i32
    %c0_i32_0 = arith.constant 0 : i32
    %2 = tpu.memref_slice %arg3[%1, %c0_i32_0] : memref<36x32xf32, #tpu.memory_space<any>> -> memref<16x32xf32, #tpu.memory_space<any>>
    %3 = tpu.memref_slice %arg6[%c0_i32] : memref<1x!tpu.dma_semaphore, #tpu.memory_space<semaphore_mem>> -> memref<1x!tpu.dma_semaphore, #tpu.memory_space<semaphore_mem>>
    %4 = tpu.memref_squeeze %3 : memref<1x!tpu.dma_semaphore, #tpu.memory_space<semaphore_mem>> -> memref<!tpu.dma_semaphore, #tpu.memory_space<semaphore_mem>>
    tpu.enqueue_dma source(%2 : memref<16x32xf32, #tpu.memory_space<any>>) target(%arg5 : memref<16x32xf32, #tpu.memory_space<vmem>>) target_semaphore(%4 : memref<!tpu.dma_semaphore, #tpu.memory_space<semaphore_mem>>)
    %c0_i32_1 = arith.constant 0 : i32
    %c0_i32_2 = arith.constant 0 : i32
    %5 = tpu.memref_slice %arg3[%1, %c0_i32_2] : memref<36x32xf32, #tpu.memory_space<any>> -> memref<16x32xf32, #tpu.memory_space<any>>
    %6 = tpu.memref_slice %arg6[%c0_i32_1] : memref<1x!tpu.dma_semaphore, #tpu.memory_space<semaphore_mem>> -> memref<1x!tpu.dma_semaphore, #tpu.memory_space<semaphore_mem>>
    %7 = tpu.memref_squeeze %6 : memref<1x!tpu.dma_semaphore, #tpu.memory_space<semaphore_mem>> -> memref<!tpu.dma_semaphore, #tpu.memory_space<semaphore_mem>>
    tpu.wait_dma2 semaphore(%7 : memref<!tpu.dma_semaphore, #tpu.memory_space<semaphore_mem>>) src(%5 : memref<16x32xf32, #tpu.memory_space<any>>) dst(%arg5 : memref<16x32xf32, #tpu.memory_space<vmem>>)
    %8 = arith.index_cast %arg0 : i32 to index
    %9 = memref.load %arg2[%8] : memref<2xi32, #tpu.memory_space<smem>>
    %10 = tpu.iota {dimensions = array<i32: 0>} : vector<16x32xi32>
    %c0 = arith.constant 0 : index
    %c0_3 = arith.constant 0 : index
    %11 = vector.load %arg5[%c0, %c0_3] : memref<16x32xf32, #tpu.memory_space<vmem>>, vector<16x32xf32>
    %12 = vector.broadcast %9 : i32 to vector<16x32xi32>
    %13 = arith.cmpi slt, %10, %12 : vector<16x32xi32>
    %cst = arith.constant 0.000000e+00 : f32
    %14 = vector.broadcast %cst : f32 to vector<16x32xf32>
    %15 = arith.select %13, %11, %14 : vector<16x32xi1>, vector<16x32xf32>
    %c0_4 = arith.constant 0 : index
    %c0_5 = arith.constant 0 : index
    %c0_6 = arith.constant 0 : index
    %16 = vector.load %arg4[%c0_4, %c0_5, %c0_6] : memref<1x16x32xf32, #tpu.memory_space<vmem>>, vector<1x16x32xf32>
    %17 = vector.shape_cast %16 : vector<1x16x32xf32> to vector<16x32xf32>
    %18 = vector.shape_cast %15 : vector<16x32xf32> to vector<1x16x32xf32>
    tpu.vector_store %arg4[%c0_4, %c0_5, %c0_6], %18 {strides = array<i32>} : memref<1x16x32xf32, #tpu.memory_space<vmem>>, vector<1x16x32xf32>,
    return
  }
  func.func @transform_1(%arg0: i32, %arg1: memref<2xi32, #tpu.memory_space<smem>>, %arg2: memref<2xi32, #tpu.memory_space<smem>>) -> (i32, i32, i32) {
    %c0_i32 = arith.constant 0 : i32
    %c0_i32_0 = arith.constant 0 : i32
    %c0_i32_1 = arith.constant 0 : i32
    return %arg0, %c0_i32, %c0_i32_0 : i32, i32, i32
  }
}

</mosaic_0001>

<llo_original>
// kernel: tpu_custom_call.1
$region0: #{tpu_custom_call.1}
  #allocation0 [shape = 'u32[]', space=smem, size = 0x4, offset = 0x4, fixed_abs, tag = 'smem constant byte address 0x4 - core index']
  #allocation1 [shape = 'u32[72,128]{1,0:T(1,128)}', space=vmem, size = 0x9000, scoped, tag = 'internal scratch']
  #allocation2 [shape = 'f32[16,32]{1,0:T(8,128)}', space=vmem, size = 0x2000, scoped, tag = 'scratch operand']
  #allocation3 [shape = 's32[1]{0}', space=sflag, size = 0x4, scoped, tag = 'scratch operand']
  #allocation4 [shape = 's32[1]{0}', space=sflag, size = 0x4, scoped, tag = 'scoped memory for tpu_custom_call.1']
  #allocation5 [shape = 'u8[512]{0}', space=smem, size = 0x200, scoped, tag = 'prefetched SMEM operand 0']
  #allocation6 [shape = 'u8[512]{0}', space=smem, size = 0x200, scoped, tag = 'prefetched SMEM operand 1']
  #allocation9 [shape = 's32[]', space=sflag, size = 0x4, offset = 0, fixed_abs, tag = 'sflag constant byte address 0x0 - dummy sync flag']
  %s0 = inlined_call_operand.vmem [shape: s32[2], index: 0, kind: input, shape index: {}]
  %s1 = inlined_call_operand.vmem [shape: s32[2], index: 1, kind: input, shape index: {}]
  %s2 = inlined_call_operand.vmem [shape: f32[36,32], index: 2, kind: input, shape index: {}]
  %s3 = inlined_call_operand.hbm [shape: f32[2,16,32], index: 3, kind: output, shape index: {}]
  %s4 = sld [smem:[#allocation0]]
  $region44: #{tpu_custom_call.1} parent=0
    _
  %s6 = ssub.s32 1, %s4
  %s7 = scalar_select 0, %s6, %s4
  %s9 = sshll.u32 %s0, 4
  %s10 = int_to_ptr.vmem [resolvable:$true] %s9
  %12 = dma.vmem_to_smem %s10, 16, [#allocation5], [#allocation4]
  %s14 = sshll.u32 %s1, 4
  %s15 = int_to_ptr.vmem [resolvable:$true] %s14
  %17 = dma.vmem_to_smem %s15, 16, [#allocation6], [#allocation4]
  %19 = dma.done [#allocation4], 32
  %20 = sfence
  $region1: #{tpu_custom_call.1} parent=0
    #allocation7 [shape = 'u8[16384]{0}', space=vmem, size = 0x4000, scoped, tag = 'output window, operand 0']
    #allocation8 [shape = 's32[2]{0}', space=sflag, size = 0x8, scoped, tag = 'scoped memory for tpu_custom_call.1']
    %21 = vsyncpa [#allocation8], 0
    %s22 = scalar_lea.sflag [#allocation8], 1
    %23 = vsyncpa %s22, 0
    loop: start=0, step=1, limit=3
    $region2: #{tpu_custom_call.1} parent=1 // loop_pre_header
      _
    $region3: #{tpu_custom_call.1} parent=1 // loop_header
      %s25 = sphi 0, %s29
      %p26 = scmp.ge.s32.totalorder %s25, 3
      %s34 = sphi 0, %s36
      %s37 = sphi 0, %s34
      %s47 = sphi 0, %s37
    $region4: #{tpu_custom_call.1} parent=1 // loop_header_branch
      %28 = sbr.rel (%p26) target = $region8
    $region5: #{tpu_custom_call.1} parent=1 // loop_body
      %s30 = ssub.s32 %s25, 1
      %s31 = sadd.s32 %s25, 1
      %s32 = ssub.s32 %s25, %s31
      %p33 = scmp.eq.s32.totalorder %s32, 0
      %s35 = sadd.s32 %s34, 1
      %s36 = scalar_select %p33, %s34, %s35
      %p38 = pneg %p33
      %p39 = scmp.eq.s32.totalorder %s25, 1
      %p40 = por %p38, %p39
      %p41 = scmp.ne.s32.totalorder %s34, %s37
      %p42 = scmp.eq.s32.totalorder %s25, 0
      %p43 = por %p41, %p42
      %p44 = scmp.ne.s32.totalorder %s34, %s37
      %p45 = scmp.eq.s32.totalorder %s30, 1
      %p46 = por %p44, %p45
      %p48 = scmp.ne.s32.totalorder %s37, %s47
      %p49 = scmp.eq.s32.totalorder %s30, 0
      %p50 = por %p48, %p49
      %p51 = scmp.lt.s32.totalorder %s25, 2
      // Predicated region
      $region9: #{tpu_custom_call.1} parent=5 // pred_check
        %p52 = pneg %p51
      $region10: #{tpu_custom_call.1} parent=5 // pred_check_branch
        %54 = sbr.rel (%p52) target = $region12
      $region11: #{tpu_custom_call.1} parent=5 // pred_region
        %p55 = pneg %p43
        %p56 = pneg %p40
        %s57 = sand.u32 %s34, 1
        %s58 = scalar_lea.sflag [#allocation8], %s57
        %s59 = sand.u32 %s34, 1
        %s60 = smul.addr %s59, 16
        %s61 = scalar_lea.vmem [#allocation7], %s60
        %s62 = sld [smem:[#allocation5 + %s25]]
        %s63 = scalar_lea.vmem %s2, %s62
        // Predicated region
        $region13: #{tpu_custom_call.1} parent=11 // pred_check
          _
        $region14: #{tpu_custom_call.1} parent=11 // pred_check_branch
          %65 = sbr.rel (0) target = $region16
        $region15: #{tpu_custom_call.1} parent=11 // pred_region
          loop: start=0, step=1, limit=1
          $region17: #{tpu_custom_call.1} parent=15 // loop_pre_header
            _
          $region18: #{tpu_custom_call.1} parent=15 // loop_header
            %s67 = sphi 0, %s71
            %p68 = scmp.ge.s32.totalorder %s67, 1
            %s72 = sphi %s63, %s63
            %s73 = sphi [#allocation2], [#allocation2]
          $region19: #{tpu_custom_call.1} parent=15 // loop_header_branch
            %70 = sbr.rel (%p68) target = $region23
          $region20: #{tpu_custom_call.1} parent=15 // loop_body
            %v74 = vld [vmem:[%s72] sm:$0xff]
            %75 = vst [vmem:[%s73] sm:$0xff] %v74
            %v76 = vld [vmem:[%s72 + $0x8] sm:$0xff]
            %77 = vst [vmem:[%s73 + $0x8] sm:$0xff] %v76
          $region21: #{tpu_custom_call.1} parent=15 // loop_footer
            %s71 = sadd.s32 1, %s67
          $region22: #{tpu_custom_call.1} parent=15 // loop_footer_branch
            %66 = sbr.rel target = $region18
          $region23: #{tpu_custom_call.1} parent=15 // loop_exit
            _
        $region16: #{tpu_custom_call.1} parent=11 // pred_fallthru
          _
        // Predicated region
        $region24: #{tpu_custom_call.1} parent=11 // pred_check
          _
        $region25: #{tpu_custom_call.1} parent=11 // pred_check_branch
          %79 = sbr.rel target = $region27
        $region26: #{tpu_custom_call.1} parent=11 // pred_region
          _
        $region27: #{tpu_custom_call.1} parent=11 // pred_fallthru
          _
        // Predicated region
        $region28: #{tpu_custom_call.1} parent=11 // pred_check
          _
        $region29: #{tpu_custom_call.1} parent=11 // pred_check_branch
          %82 = sbr.rel (0) target = $region31
        $region30: #{tpu_custom_call.1} parent=11 // pred_region
          %83 = vsyncadd [#allocation3], 256
        $region31: #{tpu_custom_call.1} parent=11 // pred_fallthru
          _
        %s84 = smul.u32 16, 1
        %s85 = sshll.u32 %s84, 4
        %86 = dma.done [#allocation3], %s85
        %s87 = sld [smem:[#allocation6 + %s25]]
        %v88 = vlaneseq
        %v89 = vshrl.u32 %v88, 7
        %v90 = vadd.s32 %v89, 8
        %v91 = vld [vmem:[#allocation2] sm:$0xff]
        %v92 = vld [vmem:[#allocation2 + $0x8] sm:$0xff]
        %v93 = vstv %s87
        %vm94 = vcmp.lt.s32.totalorder %v89, %v93
        %vm95 = vcmp.lt.s32.totalorder %v90, %v93
        %v96 = vsel %vm94, %v91, 0.0
        %v97 = vsel %vm95, %v92, 0.0
        %vm98 = vcmask 261120
        %99 = vst.msk [vmem:[%s61] sm:$0xff] %vm98, %v96
        %100 = vst.msk [vmem:[%s61 + $0x8] sm:$0xff] %vm98, %v97
        %s101 = sand.u32 %s34, 1
        %s102 = scalar_lea.sflag [#allocation8], %s101
        %s103 = sand.u32 %s34, 1
        %s104 = smul.addr %s103, 16
        %s105 = scalar_lea.vmem [#allocation7], %s104
        // Predicated region
        $region32: #{tpu_custom_call.1} parent=11 // pred_check
          %p106 = pneg %p40
        $region33: #{tpu_custom_call.1} parent=11 // pred_check_branch
          %108 = sbr.rel (%p106) target = $region35
        $region34: #{tpu_custom_call.1} parent=11 // pred_region
          %110 = vsyncadd %s102, 0
          %s111 = smul.addr %s25, 2
          %s112 = smul.addr %s111, 8
          %s113 = scalar_lea.hbm %s3, %s112
          %s114 = sshll.u32 %s105, 4
          %s115 = int_to_ptr.vmem [resolvable:$true] %s114
          %s116 = sshll.u32 %s113, 4
          %s117 = int_to_ptr.hbm [resolvable:$true] %s116
          %122 = dma.vmem_to_hbm [thread:$0]  %s115, 256, %s117, %s102, 128, 128, 8
        $region35: #{tpu_custom_call.1} parent=11 // pred_fallthru
          _
      $region12: #{tpu_custom_call.1} parent=5 // pred_fallthru
        _
      %p123 = scmp.le.s32.totalorder 1, %s25
      // Predicated region
      $region36: #{tpu_custom_call.1} parent=5 // pred_check
        %p124 = pneg %p123
      $region37: #{tpu_custom_call.1} parent=5 // pred_check_branch
        %126 = sbr.rel (%p124) target = $region39
      $region38: #{tpu_custom_call.1} parent=5 // pred_region
        %s127 = ssub.s32 %s25, 1
        // Predicated region
        $region40: #{tpu_custom_call.1} parent=38 // pred_check
          %p128 = pneg %p46
        $region41: #{tpu_custom_call.1} parent=38 // pred_check_branch
          %130 = sbr.rel (%p128) target = $region43
        $region42: #{tpu_custom_call.1} parent=38 // pred_region
          %s131 = sand.u32 %s37, 1
          %s132 = scalar_lea.sflag [#allocation8], %s131
          %s133 = sand.u32 %s37, 1
          %s134 = smul.addr %s133, 16
          %s135 = scalar_lea.vmem [#allocation7], %s134
          %137 = dma.done %s132, 256
        $region43: #{tpu_custom_call.1} parent=38 // pred_fallthru
          _
      $region39: #{tpu_custom_call.1} parent=5 // pred_fallthru
        _
    $region6: #{tpu_custom_call.1} parent=1 // loop_footer
      %s29 = sadd.s32 1, %s25
    $region7: #{tpu_custom_call.1} parent=1 // loop_footer_branch
      %24 = sbr.rel target = $region3
    $region8: #{tpu_custom_call.1} parent=1 // loop_exit
      _
    %138 = vsyncpa [#allocation8], 1
    %s139 = scalar_lea.sflag [#allocation8], 1
    %140 = vsyncpa %s139, 1
  %141 = vsyncmov [#allocation3]
  %s142 = vpop.sfrf %141
  %p143 = scmp.eq.s32.totalorder %s142, 0
  %p144 = pneg %p143
  %146 = shalt.err (%p144)

</llo_original>
